<compile_context>
chip_gen: v7x
topology: tpu7x:2x2x1
jax: 0.10.0
libtpu: 0.0.40
codegen_flags: <defaults>
</compile_context>

<pallas_src>
import functools

import jax
import jax.numpy as jnp
import numpy as np
from jax import lax
from jax.experimental import pallas as pl
from jax.experimental.pallas import tpu as pltpu

_COMPUTE_DTYPE = jnp.bfloat16      # MXU input dtype (accumulate in f32)


def _round_up(x, m):
    return ((x + m - 1) // m) * m


def _vmem_limit_bytes():
    """Generation-aware scoped-VMEM limit (<=32 MiB on v7x, <=64 MiB else)."""
    try:
        cap = int(pltpu.get_tpu_info().vmem_capacity_bytes)
    except Exception:
        cap = 64 * 1024 * 1024
    return int(min(max(cap // 2, 16 * 1024 * 1024), 64 * 1024 * 1024))


# ---------------------------------------------------------------------------
# Kernel 1: LocalRNN — GRU over size-ksize causal windows, flattened over n*l
# rows, fused x-projection, gridded over row tiles.
# ---------------------------------------------------------------------------
def _local_gru_kernel(xk_ref, wi_ref, wh_ref, bi_ref, bh_ref, out_ref):
    """
    xk_ref : (ksize, TR, d) bf16  window slab: xk[j, r] = x-pad for window pos j
    wi_ref : (d, 3H) bf16   fused input weights  [r|z|n]
    wh_ref : (H, 3H) bf16   fused hidden weights [r|z|n]
    bi_ref : (1, 3H) f32
    bh_ref : (1, 3H) f32
    out_ref: (TR, H) f32    last hidden of every causal window
    """
    ksize, tr, _ = xk_ref.shape
    hid = out_ref.shape[1]
    wi = wi_ref[...]
    wh = wh_ref[...]
    bi = jnp.broadcast_to(bi_ref[...], (tr, 3 * hid))      # hoisted broadcasts
    bh = jnp.broadcast_to(bh_ref[...], (tr, 3 * hid))
    h = jnp.zeros((tr, hid), jnp.float32)
    for j in range(ksize):                                  # ksize is small; keep unrolled
        gx = jnp.dot(xk_ref[j], wi, preferred_element_type=jnp.float32) + bi
        gh = jnp.dot(h.astype(wh.dtype), wh,
                     preferred_element_type=jnp.float32) + bh
        r = jax.nn.sigmoid(gx[:, :hid] + gh[:, :hid])
        z = jax.nn.sigmoid(gx[:, hid:2 * hid] + gh[:, hid:2 * hid])
        c = jnp.tanh(gx[:, 2 * hid:] + r * gh[:, 2 * hid:])
        h = (1.0 - z) * c + z * h
    out_ref[...] = h.astype(out_ref.dtype)


def _pick_row_tile(rows, ksize, d, hid, budget):
    per_row = 2 * ksize * d * 2 + 2 * hid * 4    # dbl-buffered xk (bf16) + out (f32)
    tr = max(8, min(1024,
                    _round_up(rows, 8),
                    (budget // max(per_row, 1)) // 8 * 8))
    rows_pad = _round_up(rows, tr)
    return tr, rows_pad


def local_rnn_forward(x, fused, ksize, vmem_limit):
    wi, wh, bi, bh = fused
    n, l, d = x.shape
    hid = wh.shape[0]
    xb = x.astype(_COMPUTE_DTYPE)
    xpad = jnp.concatenate(
        [jnp.zeros((n, ksize - 1, d), _COMPUTE_DTYPE), xb], axis=1)
    # Window slab (ksize, n*l, d): slab[j, b*l + t] = xpad[b, t + j].
    xk = jnp.stack(
        [xpad[:, j:j + l, :].reshape(n * l, d) for j in range(ksize)], axis=0)
    rows = n * l
    tr, rows_pad = _pick_row_tile(rows, ksize, d, hid, budget=vmem_limit // 2)
    if rows_pad > rows:
        xk = jnp.pad(xk, ((0, 0), (0, rows_pad - rows), (0, 0)))
    out = pl.pallas_call(
        _local_gru_kernel,
        out_shape=jax.ShapeDtypeStruct((rows_pad, hid), jnp.float32),
        grid=(rows_pad // tr,),
        in_specs=[
            pl.BlockSpec((ksize, tr, d), lambda i: (0, i, 0)),
            pl.BlockSpec(wi.shape, lambda i: (0, 0)),
            pl.BlockSpec(wh.shape, lambda i: (0, 0)),
            pl.BlockSpec(bi.shape, lambda i: (0, 0)),
            pl.BlockSpec(bh.shape, lambda i: (0, 0)),
        ],
        out_specs=pl.BlockSpec((tr, hid), lambda i: (i, 0)),
        compiler_params=pltpu.CompilerParams(
            dimension_semantics=("parallel",),
            vmem_limit_bytes=vmem_limit),
    )(xk, wi, wh, bi, bh)
    return out[:rows].reshape(n, l, hid)


# ---------------------------------------------------------------------------
# Kernel 2: global GRU layer — time-major, fused projection, serial over time,
# gridded over batch tiles.
# ---------------------------------------------------------------------------
def _global_gru_kernel(x_ref, wi_ref, wh_ref, bi_ref, bh_ref, out_ref, gx_ref,
                       *, seq_len, tb):
    """
    x_ref  : (L*TB, d)  bf16  time-major slab (row = t*TB + b_local)
    out_ref: (L*TB, H)  f32   hidden at every timestep, same row order
    gx_ref : (L*TB, 3H) f32   VMEM scratch for the hoisted x-projection
    """
    hid = out_ref.shape[-1]
    wi = wi_ref[...]
    wh = wh_ref[...]
    # Hoisted, lane-dense x-projection: one (L*TB, d) x (d, 3H) MXU dot.
    gx_ref[...] = (jnp.dot(x_ref[...], wi, preferred_element_type=jnp.float32)
                   + bi_ref[...])
    bh = jnp.broadcast_to(bh_ref[...], (tb, 3 * hid))       # hoisted broadcast

    def step(t, h):
        off = pl.multiple_of(t * tb, 8)                     # sublane-aligned
        gx = gx_ref[pl.ds(off, tb), :]                      # contiguous (TB, 3H)
        gh = jnp.dot(h.astype(wh.dtype), wh,
                     preferred_element_type=jnp.float32) + bh
        r = jax.nn.sigmoid(gx[:, :hid] + gh[:, :hid])
        z = jax.nn.sigmoid(gx[:, hid:2 * hid] + gh[:, hid:2 * hid])
        c = jnp.tanh(gx[:, 2 * hid:] + r * gh[:, 2 * hid:])
        h_new = (1.0 - z) * c + z * h
        out_ref[pl.ds(off, tb), :] = h_new.astype(out_ref.dtype)
        return h_new

    lax.fori_loop(0, seq_len, step, jnp.zeros((tb, hid), jnp.float32),
                  unroll=seq_len if seq_len <= 16 else 8)


def _pick_batch_tile(nb, seq_len, d, hid, budget):
    per_row = seq_len * (2 * d * 2        # x block, bf16, double-buffered
                         + 2 * hid * 4    # out block, f32, double-buffered
                         + 3 * hid * 4)   # gx scratch, f32, single
    tb = max(8, min(_round_up(nb, 8),
                    (budget // max(per_row, 1)) // 8 * 8))
    nb_pad = _round_up(nb, tb)
    return tb, nb_pad


def global_rnn_forward(x, fused_layers, vmem_limit):
    n, _, _ = x.shape
    out_tm = jnp.transpose(x, (1, 0, 2)).astype(jnp.float32)   # (L, n, d) time-major
    for wi, wh, bi, bh in fused_layers:
        seq_len, nb, d = out_tm.shape
        hid = wh.shape[0]
        tb, nb_pad = _pick_batch_tile(nb, seq_len, d, hid, budget=vmem_limit // 2)
        xin = out_tm
        if nb_pad > nb:
            xin = jnp.pad(xin, ((0, 0), (0, nb_pad - nb), (0, 0)))
        ntiles = nb_pad // tb
        # Layout plumbing (wrapper side): pack each batch tile as a 2D
        # (L*TB, d) slab so every in-kernel per-step access is contiguous.
        x_tiles = (xin.reshape(seq_len, ntiles, tb, d)
                      .transpose(1, 0, 2, 3)
                      .reshape(ntiles, seq_len * tb, d)
                      .astype(_COMPUTE_DTYPE))
        kernel = functools.partial(_global_gru_kernel, seq_len=seq_len, tb=tb)
        out = pl.pallas_call(
            kernel,
            out_shape=jax.ShapeDtypeStruct((ntiles, seq_len * tb, hid),
                                           jnp.float32),
            grid=(ntiles,),
            in_specs=[
                pl.BlockSpec((None, seq_len * tb, d), lambda i: (i, 0, 0)),
                pl.BlockSpec(wi.shape, lambda i: (0, 0)),
                pl.BlockSpec(wh.shape, lambda i: (0, 0)),
                pl.BlockSpec(bi.shape, lambda i: (0, 0)),
                pl.BlockSpec(bh.shape, lambda i: (0, 0)),
            ],
            out_specs=pl.BlockSpec((None, seq_len * tb, hid),
                                   lambda i: (i, 0, 0)),
            scratch_shapes=[pltpu.VMEM((seq_len * tb, 3 * hid), jnp.float32)],
            compiler_params=pltpu.CompilerParams(
                dimension_semantics=("parallel",),
                vmem_limit_bytes=vmem_limit),
        )(x_tiles, wi, wh, bi, bh)
        out_tm = (out.reshape(ntiles, seq_len, tb, hid)
                     .transpose(1, 0, 2, 3)
                     .reshape(seq_len, nb_pad, hid)[:, :nb, :])
    return out_tm                                            # (L, n, H) f32


# ---------------------------------------------------------------------------
# Parameter handling (PyTorch nn.GRU gate order [r, z, n]) + model forward
# ---------------------------------------------------------------------------
def _fuse_gru_params(params):
    wir, wiz, win, whr, whz, whn, bir, biz, bin_, bhr, bhz, bhn = params
    wi = jnp.concatenate([wir, wiz, win], axis=1).astype(_COMPUTE_DTYPE)
    wh = jnp.concatenate([whr, whz, whn], axis=1).astype(_COMPUTE_DTYPE)
    bi = jnp.concatenate([bir, biz, bin_], axis=1).astype(jnp.float32)
    bh = jnp.concatenate([bhr, bhz, bhn], axis=1).astype(jnp.float32)
    return wi, wh, bi, bh


def model_forward(tokens, l_list, emb_table, local_params, global_layer_params,
                  ksize):
    x = emb_table[tokens]                       # embedding lookup (plain JAX)
    n = x.shape[0]
    vlim = _vmem_limit_bytes()
    local_fused = _fuse_gru_params(local_params)
    global_fused = [_fuse_gru_params(p) for p in global_layer_params]
    local_output = local_rnn_forward(x, local_fused, ksize, vlim)
    # Global stack consumes the raw embeddings, matching the PyTorch Model.
    global_tm = global_rnn_forward(x, global_fused, vlim)     # (L, n, H)
    idx = l_list.astype(jnp.int32)
    gathered = global_tm[idx, jnp.arange(n), :]                # (n, H)
    return gathered, local_output


# ---------------------------------------------------------------------------
# Pure-JAX reference (unfused f32 GRU, explicit windows) for a sanity check
# ---------------------------------------------------------------------------
def _gru_cell_ref(x, h, wir, wiz, win, whr, whz, whn,
                  bir, biz, bin_, bhr, bhz, bhn):
    r = jax.nn.sigmoid(x @ wir + bir + h @ whr + bhr)
    z = jax.nn.sigmoid(x @ wiz + biz + h @ whz + bhz)
    c = jnp.tanh(x @ win + bin_ + r * (h @ whn + bhn))
    return (1.0 - z) * c + z * h


def _ref_forward(tokens, l_list, emb_table, local_params, global_layer_params,
                 ksize):
    x = emb_table[tokens]
    n, l, d = x.shape
    hid = local_params[0].shape[1]
    xpad = jnp.concatenate([jnp.zeros((n, ksize - 1, d), x.dtype), x], axis=1)
    xk = jnp.stack([xpad[:, j:j + l, :] for j in range(ksize)], axis=2)
    xk = xk.reshape(n * l, ksize, d)
    h = jnp.zeros((n * l, hid), jnp.float32)
    for j in range(ksize):
        h = _gru_cell_ref(xk[:, j, :], h, *local_params)
    local_output = h.reshape(n, l, hid)
    out = x
    for params in global_layer_params:
        hid_g = params[0].shape[1]
        hg = jnp.zeros((n, hid_g), jnp.float32)
        steps = []
        for t in range(l):
            hg = _gru_cell_ref(out[:, t, :], hg, *params)
            steps.append(hg)
        out = jnp.stack(steps, axis=1)
    idx = l_list.astype(jnp.int32)[:, None, None]
    gathered = jnp.take_along_axis(out, idx, axis=1)[:, 0, :]
    return gathered, local_output


def init_gru_params(key, in_dim, hid, scale=0.1):
    ks = jax.random.split(key, 12)
    shapes = [(in_dim, hid)] * 3 + [(hid, hid)] * 3 + [(1, hid)] * 6
    return tuple(scale * jax.random.normal(k, s, jnp.float32)
                 for k, s in zip(ks, shapes))


if __name__ == "__main__":
    vocab_size = 50
    input_dim = 32
    output_dim = 32
    n_layer = 2
    ksize = 3
    batch = 2
    seq = 8

    root = jax.random.PRNGKey(0)
    k_tok, k_emb, k_loc, k_g0, k_g1 = jax.random.split(root, 5)

    tokens = jax.random.randint(k_tok, (batch, seq), 0, vocab_size,
                                dtype=jnp.int32)
    l_list = jnp.array([3, 7], dtype=jnp.int32)
    emb_table = 0.1 * jax.random.normal(k_emb, (vocab_size, input_dim),
                                        jnp.float32)

    local_params = init_gru_params(k_loc, input_dim, output_dim)
    global_layer_params = [
        init_gru_params(k_g0, input_dim, output_dim),    # layer 0
        init_gru_params(k_g1, output_dim, output_dim),   # layer 1
    ]

    g_out, local_out = model_forward(tokens, l_list, emb_table, local_params,
                                     global_layer_params, ksize)
    jax.block_until_ready((g_out, local_out))

    g_ref, local_ref = _ref_forward(tokens, l_list, emb_table, local_params,
                                    global_layer_params, ksize)
    np.testing.assert_allclose(np.asarray(g_out), np.asarray(g_ref),
                               rtol=2e-2, atol=2e-2)
    np.testing.assert_allclose(np.asarray(local_out), np.asarray(local_ref),
                               rtol=2e-2, atol=2e-2)

    assert g_out.shape == (batch, output_dim)
    assert local_out.shape == (batch, seq, output_dim)
    print("KERNEL_OK")
</pallas_src>

<mosaic_0001>
module attributes {stable_mosaic.version = 11 : i64} {
  func.func @_local_gru_kernel(%arg0: i32, %arg1: memref<3x16x32xbf16, #tpu.memory_space<vmem>>, %arg2: memref<32x96xbf16, #tpu.memory_space<vmem>>, %arg3: memref<32x96xbf16, #tpu.memory_space<vmem>>, %arg4: memref<1x96xf32, #tpu.memory_space<vmem>>, %arg5: memref<1x96xf32, #tpu.memory_space<vmem>>, %arg6: memref<16x32xf32, #tpu.memory_space<vmem>>) attributes {dimension_semantics = [#tpu.dimension_semantics<parallel>], iteration_bounds = array<i64: 1>, scalar_prefetch = 0 : i64, scratch_operands = 0 : i64, tpu.core_type = #tpu.core_type<tc>, window_params = [{transform_indices = @transform_0, window_bounds = array<i64: 3, 16, 32>}, {pipeline_mode = #tpu.pipeline_mode<synchronous>, transform_indices = @transform_1, window_bounds = array<i64: 32, 96>}, {pipeline_mode = #tpu.pipeline_mode<synchronous>, transform_indices = @transform_2, window_bounds = array<i64: 32, 96>}, {pipeline_mode = #tpu.pipeline_mode<synchronous>, transform_indices = @transform_3, window_bounds = array<i64: 1, 96>}, {pipeline_mode = #tpu.pipeline_mode<synchronous>, transform_indices = @transform_4, window_bounds = array<i64: 1, 96>}, {transform_indices = @transform_5, window_bounds = array<i64: 16, 32>}]} {
    %c0 = arith.constant 0 : index
    %c0_0 = arith.constant 0 : index
    %0 = vector.load %arg2[%c0, %c0_0] : memref<32x96xbf16, #tpu.memory_space<vmem>>, vector<32x96xbf16>
    %c0_1 = arith.constant 0 : index
    %c0_2 = arith.constant 0 : index
    %1 = vector.load %arg3[%c0_1, %c0_2] : memref<32x96xbf16, #tpu.memory_space<vmem>>, vector<32x96xbf16>
    %c0_3 = arith.constant 0 : index
    %c0_4 = arith.constant 0 : index
    %2 = vector.load %arg4[%c0_3, %c0_4] : memref<1x96xf32, #tpu.memory_space<vmem>>, vector<1x96xf32>
    %3 = vector.shape_cast %2 : vector<1x96xf32> to vector<1x96xf32>
    %4 = vector.broadcast %3 : vector<1x96xf32> to vector<16x96xf32>
    %c0_5 = arith.constant 0 : index
    %c0_6 = arith.constant 0 : index
    %5 = vector.load %arg5[%c0_5, %c0_6] : memref<1x96xf32, #tpu.memory_space<vmem>>, vector<1x96xf32>
    %6 = vector.shape_cast %5 : vector<1x96xf32> to vector<1x96xf32>
    %7 = vector.broadcast %6 : vector<1x96xf32> to vector<16x96xf32>
    %cst = arith.constant 0.000000e+00 : f32
    %8 = vector.broadcast %cst : f32 to vector<16x32xf32>
    %c0_7 = arith.constant 0 : index
    %c0_8 = arith.constant 0 : index
    %c0_9 = arith.constant 0 : index
    %9 = vector.load %arg1[%c0_7, %c0_8, %c0_9] : memref<3x16x32xbf16, #tpu.memory_space<vmem>>, vector<1x16x32xbf16>
    %10 = vector.shape_cast %9 : vector<1x16x32xbf16> to vector<16x32xbf16>
    %cst_10 = arith.constant dense<0.000000e+00> : vector<16x96xf32>
    %11 = tpu.matmul %10, %0, %cst_10 {dimension_numbers = #tpu.dot_dimension_numbers<[1], [0], [0], [1], [0, 0, 1, 1], [], []>} : vector<16x32xbf16>, vector<32x96xbf16>, vector<16x96xf32> -> vector<16x96xf32>
    %12 = arith.addf %11, %4 : vector<16x96xf32>
    %13 = arith.truncf %8 : vector<16x32xf32> to vector<16x32xbf16>
    %cst_11 = arith.constant dense<0.000000e+00> : vector<16x96xf32>
    %14 = tpu.matmul %13, %1, %cst_11 {dimension_numbers = #tpu.dot_dimension_numbers<[1], [0], [0], [1], [0, 0, 1, 1], [], []>} : vector<16x32xbf16>, vector<32x96xbf16>, vector<16x96xf32> -> vector<16x96xf32>
    %15 = arith.addf %14, %7 : vector<16x96xf32>
    %16 = vector.extract_strided_slice %12 {offsets = [0, 0], sizes = [16, 32], strides = [1, 1]} : vector<16x96xf32> to vector<16x32xf32>
    %17 = vector.extract_strided_slice %15 {offsets = [0, 0], sizes = [16, 32], strides = [1, 1]} : vector<16x96xf32> to vector<16x32xf32>
    %18 = arith.addf %16, %17 : vector<16x32xf32>
    %19 = arith.negf %18 : vector<16x32xf32>
    %20 = math.exp %19 : vector<16x32xf32>
    %cst_12 = arith.constant 1.000000e+00 : f32
    %21 = vector.broadcast %cst_12 : f32 to vector<16x32xf32>
    %22 = arith.addf %21, %20 : vector<16x32xf32>
    %23 = arith.divf %21, %22 : vector<16x32xf32>
    %24 = vector.extract_strided_slice %12 {offsets = [0, 32], sizes = [16, 32], strides = [1, 1]} : vector<16x96xf32> to vector<16x32xf32>
    %25 = vector.extract_strided_slice %15 {offsets = [0, 32], sizes = [16, 32], strides = [1, 1]} : vector<16x96xf32> to vector<16x32xf32>
    %26 = arith.addf %24, %25 : vector<16x32xf32>
    %27 = arith.negf %26 : vector<16x32xf32>
    %28 = math.exp %27 : vector<16x32xf32>
    %cst_13 = arith.constant 1.000000e+00 : f32
    %29 = vector.broadcast %cst_13 : f32 to vector<16x32xf32>
    %30 = arith.addf %29, %28 : vector<16x32xf32>
    %31 = arith.divf %29, %30 : vector<16x32xf32>
    %32 = vector.extract_strided_slice %12 {offsets = [0, 64], sizes = [16, 32], strides = [1, 1]} : vector<16x96xf32> to vector<16x32xf32>
    %33 = vector.extract_strided_slice %15 {offsets = [0, 64], sizes = [16, 32], strides = [1, 1]} : vector<16x96xf32> to vector<16x32xf32>
    %34 = arith.mulf %23, %33 : vector<16x32xf32>
    %35 = arith.addf %32, %34 : vector<16x32xf32>
    %36 = math.tanh %35 : vector<16x32xf32>
    %cst_14 = arith.constant 1.000000e+00 : f32
    %37 = vector.broadcast %cst_14 : f32 to vector<16x32xf32>
    %38 = arith.subf %37, %31 : vector<16x32xf32>
    %39 = arith.mulf %38, %36 : vector<16x32xf32>
    %40 = arith.mulf %31, %8 : vector<16x32xf32>
    %41 = arith.addf %39, %40 : vector<16x32xf32>
    %c1 = arith.constant 1 : index
    %c0_15 = arith.constant 0 : index
    %c0_16 = arith.constant 0 : index
    %42 = vector.load %arg1[%c1, %c0_15, %c0_16] : memref<3x16x32xbf16, #tpu.memory_space<vmem>>, vector<1x16x32xbf16>
    %43 = vector.shape_cast %42 : vector<1x16x32xbf16> to vector<16x32xbf16>
    %cst_17 = arith.constant dense<0.000000e+00> : vector<16x96xf32>
    %44 = tpu.matmul %43, %0, %cst_17 {dimension_numbers = #tpu.dot_dimension_numbers<[1], [0], [0], [1], [0, 0, 1, 1], [], []>} : vector<16x32xbf16>, vector<32x96xbf16>, vector<16x96xf32> -> vector<16x96xf32>
    %45 = arith.addf %44, %4 : vector<16x96xf32>
    %46 = arith.truncf %41 : vector<16x32xf32> to vector<16x32xbf16>
    %cst_18 = arith.constant dense<0.000000e+00> : vector<16x96xf32>
    %47 = tpu.matmul %46, %1, %cst_18 {dimension_numbers = #tpu.dot_dimension_numbers<[1], [0], [0], [1], [0, 0, 1, 1], [], []>} : vector<16x32xbf16>, vector<32x96xbf16>, vector<16x96xf32> -> vector<16x96xf32>
    %48 = arith.addf %47, %7 : vector<16x96xf32>
    %49 = vector.extract_strided_slice %45 {offsets = [0, 0], sizes = [16, 32], strides = [1, 1]} : vector<16x96xf32> to vector<16x32xf32>
    %50 = vector.extract_strided_slice %48 {offsets = [0, 0], sizes = [16, 32], strides = [1, 1]} : vector<16x96xf32> to vector<16x32xf32>
    %51 = arith.addf %49, %50 : vector<16x32xf32>
    %52 = arith.negf %51 : vector<16x32xf32>
    %53 = math.exp %52 : vector<16x32xf32>
    %cst_19 = arith.constant 1.000000e+00 : f32
    %54 = vector.broadcast %cst_19 : f32 to vector<16x32xf32>
    %55 = arith.addf %54, %53 : vector<16x32xf32>
    %56 = arith.divf %54, %55 : vector<16x32xf32>
    %57 = vector.extract_strided_slice %45 {offsets = [0, 32], sizes = [16, 32], strides = [1, 1]} : vector<16x96xf32> to vector<16x32xf32>
    %58 = vector.extract_strided_slice %48 {offsets = [0, 32], sizes = [16, 32], strides = [1, 1]} : vector<16x96xf32> to vector<16x32xf32>
    %59 = arith.addf %57, %58 : vector<16x32xf32>
    %60 = arith.negf %59 : vector<16x32xf32>
    %61 = math.exp %60 : vector<16x32xf32>
    %cst_20 = arith.constant 1.000000e+00 : f32
    %62 = vector.broadcast %cst_20 : f32 to vector<16x32xf32>
    %63 = arith.addf %62, %61 : vector<16x32xf32>
    %64 = arith.divf %62, %63 : vector<16x32xf32>
    %65 = vector.extract_strided_slice %45 {offsets = [0, 64], sizes = [16, 32], strides = [1, 1]} : vector<16x96xf32> to vector<16x32xf32>
    %66 = vector.extract_strided_slice %48 {offsets = [0, 64], sizes = [16, 32], strides = [1, 1]} : vector<16x96xf32> to vector<16x32xf32>
    %67 = arith.mulf %56, %66 : vector<16x32xf32>
    %68 = arith.addf %65, %67 : vector<16x32xf32>
    %69 = math.tanh %68 : vector<16x32xf32>
    %cst_21 = arith.constant 1.000000e+00 : f32
    %70 = vector.broadcast %cst_21 : f32 to vector<16x32xf32>
    %71 = arith.subf %70, %64 : vector<16x32xf32>
    %72 = arith.mulf %71, %69 : vector<16x32xf32>
    %73 = arith.mulf %64, %41 : vector<16x32xf32>
    %74 = arith.addf %72, %73 : vector<16x32xf32>
    %c2 = arith.constant 2 : index
    %c0_22 = arith.constant 0 : index
    %c0_23 = arith.constant 0 : index
    %75 = vector.load %arg1[%c2, %c0_22, %c0_23] : memref<3x16x32xbf16, #tpu.memory_space<vmem>>, vector<1x16x32xbf16>
    %76 = vector.shape_cast %75 : vector<1x16x32xbf16> to vector<16x32xbf16>
    %cst_24 = arith.constant dense<0.000000e+00> : vector<16x96xf32>
    %77 = tpu.matmul %76, %0, %cst_24 {dimension_numbers = #tpu.dot_dimension_numbers<[1], [0], [0], [1], [0, 0, 1, 1], [], []>} : vector<16x32xbf16>, vector<32x96xbf16>, vector<16x96xf32> -> vector<16x96xf32>
    %78 = arith.addf %77, %4 : vector<16x96xf32>
    %79 = arith.truncf %74 : vector<16x32xf32> to vector<16x32xbf16>
    %cst_25 = arith.constant dense<0.000000e+00> : vector<16x96xf32>
    %80 = tpu.matmul %79, %1, %cst_25 {dimension_numbers = #tpu.dot_dimension_numbers<[1], [0], [0], [1], [0, 0, 1, 1], [], []>} : vector<16x32xbf16>, vector<32x96xbf16>, vector<16x96xf32> -> vector<16x96xf32>
    %81 = arith.addf %80, %7 : vector<16x96xf32>
    %82 = vector.extract_strided_slice %78 {offsets = [0, 0], sizes = [16, 32], strides = [1, 1]} : vector<16x96xf32> to vector<16x32xf32>
    %83 = vector.extract_strided_slice %81 {offsets = [0, 0], sizes = [16, 32], strides = [1, 1]} : vector<16x96xf32> to vector<16x32xf32>
    %84 = arith.addf %82, %83 : vector<16x32xf32>
    %85 = arith.negf %84 : vector<16x32xf32>
    %86 = math.exp %85 : vector<16x32xf32>
    %cst_26 = arith.constant 1.000000e+00 : f32
    %87 = vector.broadcast %cst_26 : f32 to vector<16x32xf32>
    %88 = arith.addf %87, %86 : vector<16x32xf32>
    %89 = arith.divf %87, %88 : vector<16x32xf32>
    %90 = vector.extract_strided_slice %78 {offsets = [0, 32], sizes = [16, 32], strides = [1, 1]} : vector<16x96xf32> to vector<16x32xf32>
    %91 = vector.extract_strided_slice %81 {offsets = [0, 32], sizes = [16, 32], strides = [1, 1]} : vector<16x96xf32> to vector<16x32xf32>
    %92 = arith.addf %90, %91 : vector<16x32xf32>
    %93 = arith.negf %92 : vector<16x32xf32>
    %94 = math.exp %93 : vector<16x32xf32>
    %cst_27 = arith.constant 1.000000e+00 : f32
    %95 = vector.broadcast %cst_27 : f32 to vector<16x32xf32>
    %96 = arith.addf %95, %94 : vector<16x32xf32>
    %97 = arith.divf %95, %96 : vector<16x32xf32>
    %98 = vector.extract_strided_slice %78 {offsets = [0, 64], sizes = [16, 32], strides = [1, 1]} : vector<16x96xf32> to vector<16x32xf32>
    %99 = vector.extract_strided_slice %81 {offsets = [0, 64], sizes = [16, 32], strides = [1, 1]} : vector<16x96xf32> to vector<16x32xf32>
    %100 = arith.mulf %89, %99 : vector<16x32xf32>
    %101 = arith.addf %98, %100 : vector<16x32xf32>
    %102 = math.tanh %101 : vector<16x32xf32>
    %cst_28 = arith.constant 1.000000e+00 : f32
    %103 = vector.broadcast %cst_28 : f32 to vector<16x32xf32>
    %104 = arith.subf %103, %97 : vector<16x32xf32>
    %105 = arith.mulf %104, %102 : vector<16x32xf32>
    %106 = arith.mulf %97, %74 : vector<16x32xf32>
    %107 = arith.addf %105, %106 : vector<16x32xf32>
    %c0_29 = arith.constant 0 : index
    %c0_30 = arith.constant 0 : index
    %108 = vector.load %arg6[%c0_29, %c0_30] : memref<16x32xf32, #tpu.memory_space<vmem>>, vector<16x32xf32>
    tpu.vector_store %arg6[%c0_29, %c0_30], %107 {strides = array<i32>} : memref<16x32xf32, #tpu.memory_space<vmem>>, vector<16x32xf32>,
    return
  }
  func.func @transform_0(%arg0: i32) -> (i32, i32, i32) {
    %c0_i32 = arith.constant 0 : i32
    %c0_i32_0 = arith.constant 0 : i32
    %c0_i32_1 = arith.constant 0 : i32
    return %c0_i32, %arg0, %c0_i32_0 : i32, i32, i32
  }
  func.func @transform_1(%arg0: i32) -> (i32, i32) {
    %c0_i32 = arith.constant 0 : i32
    %c0_i32_0 = arith.constant 0 : i32
    %c0_i32_1 = arith.constant 0 : i32
    return %c0_i32, %c0_i32_0 : i32, i32
  }
  func.func @transform_2(%arg0: i32) -> (i32, i32) {
    %c0_i32 = arith.constant 0 : i32
    %c0_i32_0 = arith.constant 0 : i32
    %c0_i32_1 = arith.constant 0 : i32
    return %c0_i32, %c0_i32_0 : i32, i32
  }
  func.func @transform_3(%arg0: i32) -> (i32, i32) {
    %c0_i32 = arith.constant 0 : i32
    %c0_i32_0 = arith.constant 0 : i32
    %c0_i32_1 = arith.constant 0 : i32
    return %c0_i32, %c0_i32_0 : i32, i32
  }
  func.func @transform_4(%arg0: i32) -> (i32, i32) {
    %c0_i32 = arith.constant 0 : i32
    %c0_i32_0 = arith.constant 0 : i32
    %c0_i32_1 = arith.constant 0 : i32
    return %c0_i32, %c0_i32_0 : i32, i32
  }
  func.func @transform_5(%arg0: i32) -> (i32, i32) {
    %c0_i32 = arith.constant 0 : i32
    %c0_i32_0 = arith.constant 0 : i32
    return %arg0, %c0_i32 : i32, i32
  }
}

</mosaic_0001>

<llo_original>
// kernel: tpu_custom_call.1
$region0: #{tpu_custom_call.1}
  #allocation0 [shape = 'u32[]', space=smem, size = 0x4, offset = 0x4, fixed_abs, tag = 'smem constant byte address 0x4 - core index']
  #allocation1 [shape = 'u32[144,128]{1,0:T(1,128)}', space=vmem, size = 0x12000, scoped, tag = 'internal scratch']
  %s0 = inlined_call_operand.hbm [shape: bf16[3,16,32], index: 0, kind: input, shape index: {}]
  %s1 = inlined_call_operand.hbm [shape: bf16[32,96], index: 1, kind: input, shape index: {}]
  %s2 = inlined_call_operand.hbm [shape: bf16[32,96], index: 2, kind: input, shape index: {}]
  %s3 = inlined_call_operand.vmem [shape: f32[1,96], index: 3, kind: input, shape index: {}]
  %s4 = inlined_call_operand.vmem [shape: f32[1,96], index: 4, kind: input, shape index: {}]
  %s5 = inlined_call_operand.hbm [shape: f32[16,32], index: 5, kind: output, shape index: {}]
  %s6 = sld [smem:[#allocation0]]
  $region42: #{tpu_custom_call.1} parent=0
    _
  %s8 = ssub.s32 1, %s6
  %s9 = scalar_select 0, %s8, %s6
  $region1: #{tpu_custom_call.1} parent=0
    #allocation2 [shape = 'u8[12288]{0}', space=vmem, size = 0x3000, scoped, tag = 'input window, operand 0, single buffered']
    #allocation3 [shape = 's32[1]{0}', space=sflag, size = 0x4, scoped, tag = 'scoped memory for tpu_custom_call.1']
    #allocation4 [shape = 's32[1]{0}', space=sflag, size = 0x4, scoped, tag = 'scoped memory for tpu_custom_call.1']
    #allocation5 [shape = 'u8[8192]{0}', space=vmem, size = 0x2000, scoped, tag = 'input window, operand 1, single buffered']
    #allocation6 [shape = 's32[1]{0}', space=sflag, size = 0x4, scoped, tag = 'scoped memory for tpu_custom_call.1']
    #allocation7 [shape = 'u8[8192]{0}', space=vmem, size = 0x2000, scoped, tag = 'input window, operand 2, single buffered']
    #allocation8 [shape = 'u8[8192]{0}', space=vmem, size = 0x2000, scoped, tag = 'output window, operand 0, single buffered']
    %10 = vsyncpa [#allocation3], 0
    %11 = vsyncpa [#allocation6], 0
    %12 = vsyncpa [#allocation4], 0
    // Predicated region
    $region2: #{tpu_custom_call.1} parent=1 // pred_check
      _
    $region3: #{tpu_custom_call.1} parent=1 // pred_check_branch
      %14 = sbr.rel (0) target = $region5
    $region4: #{tpu_custom_call.1} parent=1 // pred_region
      %s16 = ssub.s32 384, 384
      %17 = vsyncadd [#allocation3], %s16
      %s18 = sshll.u32 [#allocation2], 4
      %s19 = int_to_ptr.vmem [resolvable:$true] %s18
      %24 = dma.hbm_to_vmem [thread:$0]  %s0, 384, %s19, [#allocation3], 64, 64, 4
    $region5: #{tpu_custom_call.1} parent=1 // pred_fallthru
      _
    // Predicated region
    $region6: #{tpu_custom_call.1} parent=1 // pred_check
      _
    $region7: #{tpu_custom_call.1} parent=1 // pred_check_branch
      %26 = sbr.rel (0) target = $region9
    $region8: #{tpu_custom_call.1} parent=1 // pred_region
      %s28 = ssub.s32 256, 256
      %29 = vsyncadd [#allocation6], %s28
      %s30 = sshll.u32 [#allocation5], 4
      %s31 = int_to_ptr.vmem [resolvable:$true] %s30
      %36 = dma.hbm_to_vmem [thread:$0]  %s1, 256, %s31, [#allocation6], 64, 64, 4
    $region9: #{tpu_custom_call.1} parent=1 // pred_fallthru
      _
    // Predicated region
    $region10: #{tpu_custom_call.1} parent=1 // pred_check
      _
    $region11: #{tpu_custom_call.1} parent=1 // pred_check_branch
      %38 = sbr.rel (0) target = $region13
    $region12: #{tpu_custom_call.1} parent=1 // pred_region
      %s40 = ssub.s32 256, 256
      %41 = vsyncadd [#allocation6], %s40
      %s42 = sshll.u32 [#allocation7], 4
      %s43 = int_to_ptr.vmem [resolvable:$true] %s42
      %48 = dma.hbm_to_vmem [thread:$0]  %s2, 256, %s43, [#allocation6], 64, 64, 4
    $region13: #{tpu_custom_call.1} parent=1 // pred_fallthru
      _
    // Predicated region
    $region14: #{tpu_custom_call.1} parent=1 // pred_check
      _
    $region15: #{tpu_custom_call.1} parent=1 // pred_check_branch
      %50 = sbr.rel (0) target = $region17
    $region16: #{tpu_custom_call.1} parent=1 // pred_region
      _
    $region17: #{tpu_custom_call.1} parent=1 // pred_fallthru
      _
    // Predicated region
    $region18: #{tpu_custom_call.1} parent=1 // pred_check
      _
    $region19: #{tpu_custom_call.1} parent=1 // pred_check_branch
      %52 = sbr.rel (0) target = $region21
    $region20: #{tpu_custom_call.1} parent=1 // pred_region
      _
    $region21: #{tpu_custom_call.1} parent=1 // pred_fallthru
      _
    // Predicated region
    $region22: #{tpu_custom_call.1} parent=1 // pred_check
      _
    $region23: #{tpu_custom_call.1} parent=1 // pred_check_branch
      %54 = sbr.rel (0) target = $region25
    $region24: #{tpu_custom_call.1} parent=1 // pred_region
      %55 = dma.done [#allocation3], 384
    $region25: #{tpu_custom_call.1} parent=1 // pred_fallthru
      _
    // Predicated region
    $region26: #{tpu_custom_call.1} parent=1 // pred_check
      _
    $region27: #{tpu_custom_call.1} parent=1 // pred_check_branch
      %57 = sbr.rel (0) target = $region29
    $region28: #{tpu_custom_call.1} parent=1 // pred_region
      %58 = dma.done [#allocation6], 256
    $region29: #{tpu_custom_call.1} parent=1 // pred_fallthru
      _
    // Predicated region
    $region30: #{tpu_custom_call.1} parent=1 // pred_check
      _
    $region31: #{tpu_custom_call.1} parent=1 // pred_check_branch
      %60 = sbr.rel (0) target = $region33
    $region32: #{tpu_custom_call.1} parent=1 // pred_region
      %61 = dma.done [#allocation6], 256
    $region33: #{tpu_custom_call.1} parent=1 // pred_fallthru
      _
    %v63 = vld [vmem:[#allocation5] sm:$0xf]
    %v64 = vld [vmem:[#allocation5 + $0x4] sm:$0xf]
    %v65 = vld [vmem:[#allocation5 + $0x8] sm:$0xf]
    %v66 = vld [vmem:[#allocation5 + $0xc] sm:$0xf]
    %v67 = vld [vmem:[#allocation7] sm:$0xf]
    %v68 = vld [vmem:[#allocation7 + $0x4] sm:$0xf]
    %v69 = vld [vmem:[#allocation7 + $0x8] sm:$0xf]
    %v70 = vld [vmem:[#allocation7 + $0xc] sm:$0xf]
    %v71 = vld [vmem:[%s3] sm:$0x1]
    %v73 = vlaneseq
    %v74 = vshrl.u32 %v73, 7
    %v75 = vsub.s32 0, %v74
    %v76 = vrot.slane %v71, %v75
    %v78 = vld [vmem:[%s4] sm:$0x1]
    %v80 = vlaneseq
    %v81 = vshrl.u32 %v80, 7
    %v82 = vsub.s32 0, %v81
    %v83 = vrot.slane %v78, %v82
    %v85 = vld [vmem:[#allocation2] sm:$0xf]
    %v86 = vld [vmem:[#allocation2 + $0x4] sm:$0xf]
    %v89 = vunpack.c.l.b16 %v85
    %v90 = vunpack.c.l.b16 %v86
    %v91 = vpack.c.b16 %v90, %v89
    %v96 = vunpack.c.l.b16 %v63
    %v97 = vunpack.c.l.b16 %v64
    %v98 = vunpack.c.l.b16 %v65
    %v99 = vunpack.c.l.b16 %v66
    %v100 = vpack.c.b16 %v97, %v96
    %v101 = vpack.c.b16 %v99, %v98
    %vm104 = vcmask 261120
    %v106 = vsel %vm104, %v91, 0
    %108 = vmatprep.subr.bf16.mxu0 0
    %109 = vmatpush1.bf16.msra.mxu0 %v100
    %110 = vmatprep.subr.bf16.mxu0 0
    %111 = vmatpush1.bf16.msra.mxu0 %v101
    %112 = vmatprep.subr.bf16.mxu0 0
    %113 = vmatpush1.bf16.msra.mxu0 0
    %114 = vmatprep.subr.bf16.mxu0 0
    %115 = vmatpush1.bf16.msra.mxu0 0
    %116 = vmatprep.subr.bf16.mxu0 0
    %117 = vmatpush1.bf16.msra.mxu0 0
    %118 = vmatprep.subr.bf16.mxu0 0
    %119 = vmatpush1.bf16.msra.mxu0 0
    %120 = vmatprep.subr.bf16.mxu0 0
    %121 = vmatpush1.bf16.msra.mxu0 0
    %122 = vmatprep.subr.bf16.mxu0 0
    %123 = vmatpush1.bf16.msra.mxu0 0
    %124 = vmatprep.subr.bf16.mxu0 0
    %125 = vmatpush1.bf16.msra.mxu0 0
    %126 = vmatprep.subr.bf16.mxu0 0
    %127 = vmatpush1.bf16.msra.mxu0 0
    %128 = vmatprep.subr.bf16.mxu0 0
    %129 = vmatpush1.bf16.msra.mxu0 0
    %130 = vmatprep.subr.bf16.mxu0 0
    %131 = vmatpush1.bf16.msra.mxu0 0
    %132 = vmatprep.subr.bf16.mxu0 0
    %133 = vmatpush1.bf16.msra.mxu0 0
    %134 = vmatprep.subr.bf16.mxu0 0
    %135 = vmatpush1.bf16.msra.mxu0 0
    %136 = vmatprep.subr.bf16.mxu0 0
    %137 = vmatpush1.bf16.msra.mxu0 0
    %138 = vmatprep.subr.bf16.mxu0 0
    %139 = vmatpush1.bf16.msra.mxu0 0
    %140 = vmatprep.mubr.bf16.mxu0 0
    %141 = vmatmul.mubr.bf16.gmra.mrb[0].mxu0 %v106
    %v142 = vpop.f32.mrb[0].mxu0
    %v143 = vadd.f32 %v76, %v142
    %v144 = vpop.f32.mrb[0].mxu0
    %v145 = vpop.f32.mrb[0].mxu0
    %v146 = vadd.f32 %v76, %v145
    %v147 = vpop.f32.mrb[0].mxu0
    %148 = vdwg.mxu0
    %v153 = vunpack.c.l.b16 %v67
    %v154 = vunpack.c.l.b16 %v68
    %v155 = vunpack.c.l.b16 %v69
    %v156 = vunpack.c.l.b16 %v70
    %v157 = vpack.c.b16 %v154, %v153
    %v158 = vpack.c.b16 %v156, %v155
    %v162 = vsel %vm104, 0, 0
    %164 = vmatprep.subr.bf16.mxu0 0
    %165 = vmatpush1.bf16.msra.mxu0 %v157
    %166 = vmatprep.subr.bf16.mxu0 0
    %167 = vmatpush1.bf16.msra.mxu0 %v158
    %168 = vmatprep.subr.bf16.mxu0 0
    %169 = vmatpush1.bf16.msra.mxu0 0
    %170 = vmatprep.subr.bf16.mxu0 0
    %171 = vmatpush1.bf16.msra.mxu0 0
    %172 = vmatprep.subr.bf16.mxu0 0
    %173 = vmatpush1.bf16.msra.mxu0 0
    %174 = vmatprep.subr.bf16.mxu0 0
    %175 = vmatpush1.bf16.msra.mxu0 0
    %176 = vmatprep.subr.bf16.mxu0 0
    %177 = vmatpush1.bf16.msra.mxu0 0
    %178 = vmatprep.subr.bf16.mxu0 0
    %179 = vmatpush1.bf16.msra.mxu0 0
    %180 = vmatprep.subr.bf16.mxu0 0
    %181 = vmatpush1.bf16.msra.mxu0 0
    %182 = vmatprep.subr.bf16.mxu0 0
    %183 = vmatpush1.bf16.msra.mxu0 0
    %184 = vmatprep.subr.bf16.mxu0 0
    %185 = vmatpush1.bf16.msra.mxu0 0
    %186 = vmatprep.subr.bf16.mxu0 0
    %187 = vmatpush1.bf16.msra.mxu0 0
    %188 = vmatprep.subr.bf16.mxu0 0
    %189 = vmatpush1.bf16.msra.mxu0 0
    %190 = vmatprep.subr.bf16.mxu0 0
    %191 = vmatpush1.bf16.msra.mxu0 0
    %192 = vmatprep.subr.bf16.mxu0 0
    %193 = vmatpush1.bf16.msra.mxu0 0
    %194 = vmatprep.subr.bf16.mxu0 0
    %195 = vmatpush1.bf16.msra.mxu0 0
    %196 = vmatprep.mubr.bf16.mxu0 0
    %197 = vmatmul.mubr.bf16.gmra.mrb[0].mxu0 %v162
    %v198 = vpop.f32.mrb[0].mxu0
    %v199 = vadd.f32 %v83, %v198
    %v200 = vpop.f32.mrb[0].mxu0
    %v201 = vpop.f32.mrb[0].mxu0
    %v202 = vadd.f32 %v83, %v201
    %v203 = vpop.f32.mrb[0].mxu0
    %204 = vdwg.mxu0
    %v205 = vadd.f32 %v143, %v199
    %v206 = vadd.f32 %v146, %v202
    %v207 = vxor.u32 %v205, 2147483648
    %v208 = vxor.u32 %v206, 2147483648
    %v209 = vmul.f32 %v207, 1.442695
    %v210 = vpow.pop %v209
    %v211 = vmul.f32 %v208, 1.442695
    %v212 = vpow.pop %v211
    %v213 = vadd.f32 %v210, 1.0
    %v214 = vadd.f32 %v212, 1.0
    %v215 = vrcp.pop %v213
    %v216 = vmul.f32 1.0, %v215
    %v217 = vrcp.pop %v214
    %v218 = vmul.f32 1.0, %v217
    %221 = vrot.lane.b32.xlu0 %v199, 64
    %v222 = vpop.permute.xlu0 %221
    %223 = vrot.lane.b32.xlu0 %v202, 64
    %v224 = vpop.permute.xlu0 %223
    %v227 = vmul.f32 %v216, %v222
    %v228 = vmul.f32 %v218, %v224
    %231 = vrot.lane.b32.xlu0 %v227, 64
    %v232 = vpop.permute.xlu0 %231
    %233 = vrot.lane.b32.xlu0 %v228, 64
    %v234 = vpop.permute.xlu0 %233
    %v237 = vadd.f32 %v143, %v232
    %v238 = vadd.f32 %v146, %v234
    %v239 = vtanh.pop %v237
    %v240 = vtanh.pop %v238
    %v241 = vsub.f32 1.0, %v216
    %v242 = vsub.f32 1.0, %v218
    %245 = vrot.lane.b32.xlu0 %v239, 96
    %v246 = vpop.permute.xlu0 %245
    %247 = vrot.lane.b32.xlu0 %v240, 96
    %v248 = vpop.permute.xlu0 %247
    %v251 = vmul.f32 %v241, %v246
    %v252 = vmul.f32 %v242, %v248
    %v253 = vmul.f32 %v216, 0.0
    %v254 = vmul.f32 %v218, 0.0
    %v255 = vadd.f32 %v251, %v253
    %v256 = vadd.f32 %v252, %v254
    %s257 = scalar_lea.vmem [#allocation2], 8
    %v258 = vld [vmem:[%s257] sm:$0xf]
    %v259 = vld [vmem:[%s257 + $0x4] sm:$0xf]
    %v262 = vunpack.c.l.b16 %v258
    %v263 = vunpack.c.l.b16 %v259
    %v264 = vpack.c.b16 %v263, %v262
    %v266 = vsel %vm104, %v264, 0
    %268 = vmatprep.subr.bf16.mxu0 0
    %269 = vmatpush1.bf16.msra.mxu0 %v100
    %270 = vmatprep.subr.bf16.mxu0 0
    %271 = vmatpush1.bf16.msra.mxu0 %v101
    %272 = vmatprep.subr.bf16.mxu0 0
    %273 = vmatpush1.bf16.msra.mxu0 0
    %274 = vmatprep.subr.bf16.mxu0 0
    %275 = vmatpush1.bf16.msra.mxu0 0
    %276 = vmatprep.subr.bf16.mxu0 0
    %277 = vmatpush1.bf16.msra.mxu0 0
    %278 = vmatprep.subr.bf16.mxu0 0
    %279 = vmatpush1.bf16.msra.mxu0 0
    %280 = vmatprep.subr.bf16.mxu0 0
    %281 = vmatpush1.bf16.msra.mxu0 0
    %282 = vmatprep.subr.bf16.mxu0 0
    %283 = vmatpush1.bf16.msra.mxu0 0
    %284 = vmatprep.subr.bf16.mxu0 0
    %285 = vmatpush1.bf16.msra.mxu0 0
    %286 = vmatprep.subr.bf16.mxu0 0
    %287 = vmatpush1.bf16.msra.mxu0 0
    %288 = vmatprep.subr.bf16.mxu0 0
    %289 = vmatpush1.bf16.msra.mxu0 0
    %290 = vmatprep.subr.bf16.mxu0 0
    %291 = vmatpush1.bf16.msra.mxu0 0
    %292 = vmatprep.subr.bf16.mxu0 0
    %293 = vmatpush1.bf16.msra.mxu0 0
    %294 = vmatprep.subr.bf16.mxu0 0
    %295 = vmatpush1.bf16.msra.mxu0 0
    %296 = vmatprep.subr.bf16.mxu0 0
    %297 = vmatpush1.bf16.msra.mxu0 0
    %298 = vmatprep.subr.bf16.mxu0 0
    %299 = vmatpush1.bf16.msra.mxu0 0
    %300 = vmatprep.mubr.bf16.mxu0 0
    %301 = vmatmul.mubr.bf16.gmra.mrb[0].mxu0 %v266
    %v302 = vpop.f32.mrb[0].mxu0
    %v303 = vadd.f32 %v76, %v302
    %v304 = vpop.f32.mrb[0].mxu0
    %v305 = vpop.f32.mrb[0].mxu0
    %v306 = vadd.f32 %v76, %v305
    %v307 = vpop.f32.mrb[0].mxu0
    %308 = vdwg.mxu0
    %v309 = vpack.c.bf16 %v256, %v255
    %311 = vrot.lane.b32.xlu0 %v309, 96
    %v312 = vpop.permute.xlu0 %311
    %v314 = vsel %vm104, %v312, 0
    %316 = vmatprep.subr.bf16.mxu0 0
    %317 = vmatpush1.bf16.msra.mxu0 %v157
    %318 = vmatprep.subr.bf16.mxu0 0
    %319 = vmatpush1.bf16.msra.mxu0 %v158
    %320 = vmatprep.subr.bf16.mxu0 0
    %321 = vmatpush1.bf16.msra.mxu0 0
    %322 = vmatprep.subr.bf16.mxu0 0
    %323 = vmatpush1.bf16.msra.mxu0 0
    %324 = vmatprep.subr.bf16.mxu0 0
    %325 = vmatpush1.bf16.msra.mxu0 0
    %326 = vmatprep.subr.bf16.mxu0 0
    %327 = vmatpush1.bf16.msra.mxu0 0
    %328 = vmatprep.subr.bf16.mxu0 0
    %329 = vmatpush1.bf16.msra.mxu0 0
    %330 = vmatprep.subr.bf16.mxu0 0
    %331 = vmatpush1.bf16.msra.mxu0 0
    %332 = vmatprep.subr.bf16.mxu0 0
    %333 = vmatpush1.bf16.msra.mxu0 0
    %334 = vmatprep.subr.bf16.mxu0 0
    %335 = vmatpush1.bf16.msra.mxu0 0
    %336 = vmatprep.subr.bf16.mxu0 0
    %337 = vmatpush1.bf16.msra.mxu0 0
    %338 = vmatprep.subr.bf16.mxu0 0
    %339 = vmatpush1.bf16.msra.mxu0 0
    %340 = vmatprep.subr.bf16.mxu0 0
    %341 = vmatpush1.bf16.msra.mxu0 0
    %342 = vmatprep.subr.bf16.mxu0 0
    %343 = vmatpush1.bf16.msra.mxu0 0
    %344 = vmatprep.subr.bf16.mxu0 0
    %345 = vmatpush1.bf16.msra.mxu0 0
    %346 = vmatprep.subr.bf16.mxu0 0
    %347 = vmatpush1.bf16.msra.mxu0 0
    %348 = vmatprep.mubr.bf16.mxu0 0
    %349 = vmatmul.mubr.bf16.gmra.mrb[0].mxu0 %v314
    %v350 = vpop.f32.mrb[0].mxu0
    %v351 = vadd.f32 %v83, %v350
    %v352 = vpop.f32.mrb[0].mxu0
    %v353 = vpop.f32.mrb[0].mxu0
    %v354 = vadd.f32 %v83, %v353
    %v355 = vpop.f32.mrb[0].mxu0
    %356 = vdwg.mxu0
    %v357 = vadd.f32 %v303, %v351
    %v358 = vadd.f32 %v306, %v354
    %v359 = vxor.u32 %v357, 2147483648
    %v360 = vxor.u32 %v358, 2147483648
    %v361 = vmul.f32 %v359, 1.442695
    %v362 = vpow.pop %v361
    %v363 = vmul.f32 %v360, 1.442695
    %v364 = vpow.pop %v363
    %v365 = vadd.f32 %v362, 1.0
    %v366 = vadd.f32 %v364, 1.0
    %v367 = vrcp.pop %v365
    %v368 = vmul.f32 1.0, %v367
    %v369 = vrcp.pop %v366
    %v370 = vmul.f32 1.0, %v369
    %373 = vrot.lane.b32.xlu0 %v351, 64
    %v374 = vpop.permute.xlu0 %373
    %375 = vrot.lane.b32.xlu0 %v354, 64
    %v376 = vpop.permute.xlu0 %375
    %v379 = vmul.f32 %v368, %v374
    %v380 = vmul.f32 %v370, %v376
    %383 = vrot.lane.b32.xlu0 %v379, 64
    %v384 = vpop.permute.xlu0 %383
    %385 = vrot.lane.b32.xlu0 %v380, 64
    %v386 = vpop.permute.xlu0 %385
    %v389 = vadd.f32 %v303, %v384
    %v390 = vadd.f32 %v306, %v386
    %v391 = vtanh.pop %v389
    %v392 = vtanh.pop %v390
    %v393 = vsub.f32 1.0, %v368
    %v394 = vsub.f32 1.0, %v370
    %397 = vrot.lane.b32.xlu0 %v391, 96
    %v398 = vpop.permute.xlu0 %397
    %399 = vrot.lane.b32.xlu0 %v392, 96
    %v400 = vpop.permute.xlu0 %399
    %v403 = vmul.f32 %v393, %v398
    %v404 = vmul.f32 %v394, %v400
    %v405 = vmul.f32 %v368, %v255
    %v406 = vmul.f32 %v370, %v256
    %v407 = vadd.f32 %v403, %v405
    %v408 = vadd.f32 %v404, %v406
    %s409 = scalar_lea.vmem [#allocation2], 16
    %v410 = vld [vmem:[%s409] sm:$0xf]
    %v411 = vld [vmem:[%s409 + $0x4] sm:$0xf]
    %v414 = vunpack.c.l.b16 %v410
    %v415 = vunpack.c.l.b16 %v411
    %v416 = vpack.c.b16 %v415, %v414
    %v418 = vsel %vm104, %v416, 0
    %420 = vmatprep.subr.bf16.mxu0 0
    %421 = vmatpush1.bf16.msra.mxu0 %v100
    %422 = vmatprep.subr.bf16.mxu0 0
    %423 = vmatpush1.bf16.msra.mxu0 %v101
    %424 = vmatprep.subr.bf16.mxu0 0
    %425 = vmatpush1.bf16.msra.mxu0 0
    %426 = vmatprep.subr.bf16.mxu0 0
    %427 = vmatpush1.bf16.msra.mxu0 0
    %428 = vmatprep.subr.bf16.mxu0 0
    %429 = vmatpush1.bf16.msra.mxu0 0
    %430 = vmatprep.subr.bf16.mxu0 0
    %431 = vmatpush1.bf16.msra.mxu0 0
    %432 = vmatprep.subr.bf16.mxu0 0
    %433 = vmatpush1.bf16.msra.mxu0 0
    %434 = vmatprep.subr.bf16.mxu0 0
    %435 = vmatpush1.bf16.msra.mxu0 0
    %436 = vmatprep.subr.bf16.mxu0 0
    %437 = vmatpush1.bf16.msra.mxu0 0
    %438 = vmatprep.subr.bf16.mxu0 0
    %439 = vmatpush1.bf16.msra.mxu0 0
    %440 = vmatprep.subr.bf16.mxu0 0
    %441 = vmatpush1.bf16.msra.mxu0 0
    %442 = vmatprep.subr.bf16.mxu0 0
    %443 = vmatpush1.bf16.msra.mxu0 0
    %444 = vmatprep.subr.bf16.mxu0 0
    %445 = vmatpush1.bf16.msra.mxu0 0
    %446 = vmatprep.subr.bf16.mxu0 0
    %447 = vmatpush1.bf16.msra.mxu0 0
    %448 = vmatprep.subr.bf16.mxu0 0
    %449 = vmatpush1.bf16.msra.mxu0 0
    %450 = vmatprep.subr.bf16.mxu0 0
    %451 = vmatpush1.bf16.msra.mxu0 0
    %452 = vmatprep.mubr.bf16.mxu0 0
    %453 = vmatmul.mubr.bf16.gmra.mrb[0].mxu0 %v418
    %v454 = vpop.f32.mrb[0].mxu0
    %v455 = vadd.f32 %v76, %v454
    %v456 = vpop.f32.mrb[0].mxu0
    %v457 = vpop.f32.mrb[0].mxu0
    %v458 = vadd.f32 %v76, %v457
    %v459 = vpop.f32.mrb[0].mxu0
    %460 = vdwg.mxu0
    %v461 = vpack.c.bf16 %v408, %v407
    %463 = vrot.lane.b32.xlu0 %v461, 96
    %v464 = vpop.permute.xlu0 %463
    %v466 = vsel %vm104, %v464, 0
    %468 = vmatprep.subr.bf16.mxu0 0
    %469 = vmatpush1.bf16.msra.mxu0 %v157
    %470 = vmatprep.subr.bf16.mxu0 0
    %471 = vmatpush1.bf16.msra.mxu0 %v158
    %472 = vmatprep.subr.bf16.mxu0 0
    %473 = vmatpush1.bf16.msra.mxu0 0
    %474 = vmatprep.subr.bf16.mxu0 0
    %475 = vmatpush1.bf16.msra.mxu0 0
    %476 = vmatprep.subr.bf16.mxu0 0
    %477 = vmatpush1.bf16.msra.mxu0 0
    %478 = vmatprep.subr.bf16.mxu0 0
    %479 = vmatpush1.bf16.msra.mxu0 0
    %480 = vmatprep.subr.bf16.mxu0 0
    %481 = vmatpush1.bf16.msra.mxu0 0
    %482 = vmatprep.subr.bf16.mxu0 0
    %483 = vmatpush1.bf16.msra.mxu0 0
    %484 = vmatprep.subr.bf16.mxu0 0
    %485 = vmatpush1.bf16.msra.mxu0 0
    %486 = vmatprep.subr.bf16.mxu0 0
    %487 = vmatpush1.bf16.msra.mxu0 0
    %488 = vmatprep.subr.bf16.mxu0 0
    %489 = vmatpush1.bf16.msra.mxu0 0
    %490 = vmatprep.subr.bf16.mxu0 0
    %491 = vmatpush1.bf16.msra.mxu0 0
    %492 = vmatprep.subr.bf16.mxu0 0
    %493 = vmatpush1.bf16.msra.mxu0 0
    %494 = vmatprep.subr.bf16.mxu0 0
    %495 = vmatpush1.bf16.msra.mxu0 0
    %496 = vmatprep.subr.bf16.mxu0 0
    %497 = vmatpush1.bf16.msra.mxu0 0
    %498 = vmatprep.subr.bf16.mxu0 0
    %499 = vmatpush1.bf16.msra.mxu0 0
    %500 = vmatprep.mubr.bf16.mxu0 0
    %501 = vmatmul.mubr.bf16.gmra.mrb[0].mxu0 %v466
    %v502 = vpop.f32.mrb[0].mxu0
    %v503 = vadd.f32 %v83, %v502
    %v504 = vpop.f32.mrb[0].mxu0
    %v505 = vpop.f32.mrb[0].mxu0
    %v506 = vadd.f32 %v83, %v505
    %v507 = vpop.f32.mrb[0].mxu0
    %508 = vdwg.mxu0
    %v509 = vadd.f32 %v455, %v503
    %v510 = vadd.f32 %v458, %v506
    %v511 = vxor.u32 %v509, 2147483648
    %v512 = vxor.u32 %v510, 2147483648
    %v513 = vmul.f32 %v511, 1.442695
    %v514 = vpow.pop %v513
    %v515 = vmul.f32 %v512, 1.442695
    %v516 = vpow.pop %v515
    %v517 = vadd.f32 %v514, 1.0
    %v518 = vadd.f32 %v516, 1.0
    %v519 = vrcp.pop %v517
    %v520 = vmul.f32 1.0, %v519
    %v521 = vrcp.pop %v518
    %v522 = vmul.f32 1.0, %v521
    %525 = vrot.lane.b32.xlu0 %v503, 64
    %v526 = vpop.permute.xlu0 %525
    %527 = vrot.lane.b32.xlu0 %v506, 64
    %v528 = vpop.permute.xlu0 %527
    %v531 = vmul.f32 %v520, %v526
    %v532 = vmul.f32 %v522, %v528
    %535 = vrot.lane.b32.xlu0 %v531, 64
    %v536 = vpop.permute.xlu0 %535
    %537 = vrot.lane.b32.xlu0 %v532, 64
    %v538 = vpop.permute.xlu0 %537
    %v541 = vadd.f32 %v455, %v536
    %v542 = vadd.f32 %v458, %v538
    %v543 = vtanh.pop %v541
    %v544 = vtanh.pop %v542
    %v545 = vsub.f32 1.0, %v520
    %v546 = vsub.f32 1.0, %v522
    %549 = vrot.lane.b32.xlu0 %v543, 96
    %v550 = vpop.permute.xlu0 %549
    %551 = vrot.lane.b32.xlu0 %v544, 96
    %v552 = vpop.permute.xlu0 %551
    %v555 = vmul.f32 %v545, %v550
    %v556 = vmul.f32 %v546, %v552
    %v557 = vmul.f32 %v520, %v407
    %v558 = vmul.f32 %v522, %v408
    %v559 = vadd.f32 %v555, %v557
    %v560 = vadd.f32 %v556, %v558
    %563 = vrot.lane.b32.xlu0 %v559, 96
    %v564 = vpop.permute.xlu0 %563
    %565 = vrot.lane.b32.xlu0 %v560, 96
    %v566 = vpop.permute.xlu0 %565
    %569 = vst.msk [vmem:[#allocation8] sm:$0xff] %vm104, %v564
    %570 = vst.msk [vmem:[#allocation8 + $0x8] sm:$0xff] %vm104, %v566
    // Predicated region
    $region34: #{tpu_custom_call.1} parent=1 // pred_check
      _
    $region35: #{tpu_custom_call.1} parent=1 // pred_check_branch
      %572 = sbr.rel (0) target = $region37
    $region36: #{tpu_custom_call.1} parent=1 // pred_region
      %s574 = ssub.s32 256, 256
      %575 = vsyncadd [#allocation4], %s574
      %s576 = sshll.u32 [#allocation8], 4
      %s577 = int_to_ptr.vmem [resolvable:$true] %s576
      %582 = dma.vmem_to_hbm [thread:$0]  %s577, 256, %s5, [#allocation4], 128, 128, 8
    $region37: #{tpu_custom_call.1} parent=1 // pred_fallthru
      _
    // Predicated region
    $region38: #{tpu_custom_call.1} parent=1 // pred_check
      _
    $region39: #{tpu_custom_call.1} parent=1 // pred_check_branch
      %584 = sbr.rel (0) target = $region41
    $region40: #{tpu_custom_call.1} parent=1 // pred_region
      %585 = dma.done [#allocation4], 256
    $region41: #{tpu_custom_call.1} parent=1 // pred_fallthru
      _
    %586 = vsyncpa [#allocation3], 1
    %587 = vsyncpa [#allocation6], 1
    %588 = vsyncpa [#allocation4], 1

</llo_original>
